<compile_context>
chip_gen: v7x
topology: tpu7x:2x2x1
jax: 0.10.0
libtpu: 0.0.40
codegen_flags: <defaults>
</compile_context>

<pallas_src>
import functools

import jax
import jax.numpy as jnp
from jax import lax
from jax.experimental import pallas as pl
from jax.experimental.pallas import tpu as pltpu

LANES = 128


def _flash_attn_kernel(x_q_ref, x_kv_ref, wq_ref, wkv_ref, o_ref,
                       q_sc, m_sc, l_sc, acc_sc, *, scale, tq, tk):
    # x_q_ref : (tq, C)   query-tile slice of x
    # x_kv_ref: (tk, C)   key/value-tile slice of x
    # wq_ref  : (C, Hp)   padded query weights
    # wkv_ref : (C, 2*Hp) padded, fused key|value weights
    # o_ref   : (tq, Hp)  output tile (padded head dim)
    qi = pl.program_id(1)
    ki = pl.program_id(2)
    Hp = q_sc.shape[-1]

    @pl.when(ki == 0)
    def _init():
        # Project this query tile once per (b, qi); fold in the scale
        # (reference multiplies by sqrt(head_size)).
        q = jnp.dot(x_q_ref[...], wq_ref[...],
                    preferred_element_type=jnp.float32)
        q_sc[...] = q * scale
        m_sc[...] = jnp.full_like(m_sc, -jnp.inf)
        l_sc[...] = jnp.zeros_like(l_sc)
        acc_sc[...] = jnp.zeros_like(acc_sc)

    # Skip kv tiles that lie entirely above the causal diagonal.
    @pl.when(ki * tk <= qi * tq + (tq - 1))
    def _compute():
        # Fused K/V projection: (tk, C) @ (C, 2*Hp).
        kv = jnp.dot(x_kv_ref[...], wkv_ref[...],
                     preferred_element_type=jnp.float32)
        k = kv[:, :Hp]
        v = kv[:, Hp:]

        # q @ k^T without materializing a transpose.
        s = lax.dot_general(q_sc[...], k, (((1,), (1,)), ((), ())),
                            preferred_element_type=jnp.float32)  # (tq, tk)

        row = qi * tq + lax.broadcasted_iota(jnp.int32, (tq, tk), 0)
        col = ki * tk + lax.broadcasted_iota(jnp.int32, (tq, tk), 1)
        s = jnp.where(col <= row, s, -jnp.inf)

        # Online softmax update.
        m_prev = m_sc[...]
        m_new = jnp.maximum(m_prev, jnp.max(s, axis=-1, keepdims=True))
        alpha = jnp.exp(m_prev - m_new)
        p = jnp.exp(s - m_new)
        l_sc[...] = alpha * l_sc[...] + jnp.sum(p, axis=-1, keepdims=True)
        acc_sc[...] = alpha * acc_sc[...] + jnp.dot(
            p.astype(v.dtype), v, preferred_element_type=jnp.float32)
        m_sc[...] = m_new

    @pl.when(ki == pl.num_programs(2) - 1)
    def _finalize():
        inv_l = pl.reciprocal(l_sc[...], approx=False)
        o_ref[...] = (acc_sc[...] * inv_l).astype(o_ref.dtype)


def self_attention(x, wq, wk, wv, *, tq=128, tk=128):
    """x: (B, T, C); wq/wk/wv: (C, H). Returns (B, T, H)."""
    B, T, C = x.shape
    H = wq.shape[1]
    assert wq.shape == (C, H) and wk.shape == (C, H) and wv.shape == (C, H)

    # Pad the head dim to a full 128-lane register: lane-dense output stores
    # and full MXU output-lane utilization. Zero padding keeps results exact.
    Hp = ((H + LANES - 1) // LANES) * LANES

    def pad_h(w):
        return jnp.pad(w, ((0, 0), (0, Hp - H))) if Hp != H else w

    wq_p = pad_h(wq)                                       # (C, Hp)
    wkv_p = jnp.concatenate([pad_h(wk), pad_h(wv)], axis=1)  # (C, 2*Hp)

    tq = min(tq, T)
    tk = min(tk, T)
    assert T % tq == 0 and T % tk == 0, "T must be divisible by tile sizes"
    grid = (B, T // tq, T // tk)

    scale = float(H) ** 0.5  # reference *multiplies* by sqrt(head_size)
    kernel = functools.partial(_flash_attn_kernel, scale=scale, tq=tq, tk=tk)

    out_p = pl.pallas_call(
        kernel,
        out_shape=jax.ShapeDtypeStruct((B, T, Hp), x.dtype),
        grid=grid,
        in_specs=[
            # x for the query tile (constant across ki -> fetched once per qi)
            pl.BlockSpec((None, tq, C), lambda b, qi, ki: (b, qi, 0)),
            # x for the key/value tile (streams along ki)
            pl.BlockSpec((None, tk, C), lambda b, qi, ki: (b, ki, 0)),
            # weights: constant block index -> resident across the grid
            pl.BlockSpec((C, Hp), lambda b, qi, ki: (0, 0)),
            pl.BlockSpec((C, 2 * Hp), lambda b, qi, ki: (0, 0)),
        ],
        out_specs=pl.BlockSpec((None, tq, Hp), lambda b, qi, ki: (b, qi, 0)),
        scratch_shapes=[
            pltpu.VMEM((tq, Hp), jnp.float32),  # projected + scaled q tile
            pltpu.VMEM((tq, 1), jnp.float32),   # running max
            pltpu.VMEM((tq, 1), jnp.float32),   # running denominator
            pltpu.VMEM((tq, Hp), jnp.float32),  # output accumulator
        ],
        compiler_params=pltpu.CompilerParams(
            dimension_semantics=("parallel", "parallel", "arbitrary")),
    )(x, x, wq_p, wkv_p)

    return out_p[..., :H] if Hp != H else out_p


def self_attention_ref(x, wq, wk, wv):
    """Pure-JAX reference mirroring the PyTorch forward exactly."""
    q = x @ wq
    k = x @ wk
    v = x @ wv
    T = x.shape[1]
    weights = q @ jnp.swapaxes(k, -2, -1) * (k.shape[-1] ** 0.5)
    mask = jnp.tril(jnp.ones((T, T)))
    weights = jnp.where(mask == 0, -jnp.inf, weights)
    weights = jax.nn.softmax(weights, axis=-1)
    return weights @ v


if __name__ == "__main__":
    # Small shapes consistent with the module: batch=2, T=8, n_embed=32, head_size=16
    B, T, C, H = 2, 8, 32, 16
    key = jax.random.PRNGKey(0)
    kx, kq, kk, kv = jax.random.split(key, 4)

    x = jax.random.normal(kx, (B, T, C), dtype=jnp.float32)
    # Deterministic parameter init (synthetic): weights stored as (C, H) = W_torch.T
    wq = jax.random.normal(kq, (C, H), dtype=jnp.float32) * (1.0 / (C ** 0.5))
    wk = jax.random.normal(kk, (C, H), dtype=jnp.float32) * (1.0 / (C ** 0.5))
    wv = jax.random.normal(kv, (C, H), dtype=jnp.float32) * (1.0 / (C ** 0.5))

    out = self_attention(x, wq, wk, wv)
    out = jax.block_until_ready(out)

    ref = self_attention_ref(x, wq, wk, wv)
    assert out.shape == (B, T, H)
    assert jnp.allclose(out, ref, atol=1e-5, rtol=1e-5), "mismatch vs reference"

    print("KERNEL_OK")
</pallas_src>

<mosaic_0001>
module attributes {stable_mosaic.version = 11 : i64} {
  func.func @_flash_attn_kernel(%arg0: i32, %arg1: i32, %arg2: i32, %arg3: memref<1x8x32xf32, #tpu.memory_space<vmem>>, %arg4: memref<1x8x32xf32, #tpu.memory_space<vmem>>, %arg5: memref<32x128xf32, #tpu.memory_space<vmem>>, %arg6: memref<32x256xf32, #tpu.memory_space<vmem>>, %arg7: memref<1x8x128xf32, #tpu.memory_space<vmem>>, %arg8: memref<8x128xf32, #tpu.memory_space<vmem>>, %arg9: memref<8x1xf32, #tpu.memory_space<vmem>>, %arg10: memref<8x1xf32, #tpu.memory_space<vmem>>, %arg11: memref<8x128xf32, #tpu.memory_space<vmem>>) attributes {dimension_semantics = [#tpu.dimension_semantics<parallel>, #tpu.dimension_semantics<parallel>, #tpu.dimension_semantics<arbitrary>], iteration_bounds = array<i64: 2, 1, 1>, scalar_prefetch = 0 : i64, scratch_operands = 4 : i64, tpu.core_type = #tpu.core_type<tc>, window_params = [{transform_indices = @transform_0, window_bounds = array<i64: 1, 8, 32>}, {transform_indices = @transform_1, window_bounds = array<i64: 1, 8, 32>}, {pipeline_mode = #tpu.pipeline_mode<synchronous>, transform_indices = @transform_2, window_bounds = array<i64: 32, 128>}, {pipeline_mode = #tpu.pipeline_mode<synchronous>, transform_indices = @transform_3, window_bounds = array<i64: 32, 256>}, {transform_indices = @transform_4, window_bounds = array<i64: 1, 8, 128>}]} {
    %c0_i32 = arith.constant 0 : i32
    %0 = arith.cmpi eq, %arg2, %c0_i32 : i32
    %1 = arith.extui %0 : i1 to i32
    %c0_i32_0 = arith.constant 0 : i32
    %2 = arith.cmpi ne, %1, %c0_i32_0 : i32
    scf.if %2 {
      %c0 = arith.constant 0 : index
      %c0_5 = arith.constant 0 : index
      %c0_6 = arith.constant 0 : index
      %12 = vector.load %arg3[%c0, %c0_5, %c0_6] : memref<1x8x32xf32, #tpu.memory_space<vmem>>, vector<1x8x32xf32>
      %13 = vector.shape_cast %12 : vector<1x8x32xf32> to vector<8x32xf32>
      %c0_7 = arith.constant 0 : index
      %c0_8 = arith.constant 0 : index
      %14 = vector.load %arg5[%c0_7, %c0_8] : memref<32x128xf32, #tpu.memory_space<vmem>>, vector<32x128xf32>
      %cst = arith.constant dense<0.000000e+00> : vector<8x128xf32>
      %15 = tpu.matmul %13, %14, %cst {dimension_numbers = #tpu.dot_dimension_numbers<[1], [0], [0], [1], [0, 0, 1, 1], [], []>} : vector<8x32xf32>, vector<32x128xf32>, vector<8x128xf32> -> vector<8x128xf32>
      %cst_9 = arith.constant 4.000000e+00 : f32
      %16 = vector.broadcast %cst_9 : f32 to vector<8x128xf32>
      %17 = arith.mulf %15, %16 : vector<8x128xf32>
      %c0_10 = arith.constant 0 : index
      %c0_11 = arith.constant 0 : index
      %18 = vector.load %arg8[%c0_10, %c0_11] : memref<8x128xf32, #tpu.memory_space<vmem>>, vector<8x128xf32>
      tpu.vector_store %arg8[%c0_10, %c0_11], %17 {strides = array<i32>} : memref<8x128xf32, #tpu.memory_space<vmem>>, vector<8x128xf32>,
      %cst_12 = arith.constant 0xFF800000 : f32
      %19 = vector.broadcast %cst_12 : f32 to vector<8x1xf32>
      %c0_13 = arith.constant 0 : index
      %c0_14 = arith.constant 0 : index
      %20 = vector.load %arg9[%c0_13, %c0_14] : memref<8x1xf32, #tpu.memory_space<vmem>>, vector<8x1xf32>
      tpu.vector_store %arg9[%c0_13, %c0_14], %19 {strides = array<i32>} : memref<8x1xf32, #tpu.memory_space<vmem>>, vector<8x1xf32>,
      %cst_15 = arith.constant 0.000000e+00 : f32
      %21 = vector.broadcast %cst_15 : f32 to vector<8x1xf32>
      %c0_16 = arith.constant 0 : index
      %c0_17 = arith.constant 0 : index
      %22 = vector.load %arg10[%c0_16, %c0_17] : memref<8x1xf32, #tpu.memory_space<vmem>>, vector<8x1xf32>
      tpu.vector_store %arg10[%c0_16, %c0_17], %21 {strides = array<i32>} : memref<8x1xf32, #tpu.memory_space<vmem>>, vector<8x1xf32>,
      %cst_18 = arith.constant 0.000000e+00 : f32
      %23 = vector.broadcast %cst_18 : f32 to vector<8x128xf32>
      %c0_19 = arith.constant 0 : index
      %c0_20 = arith.constant 0 : index
      %24 = vector.load %arg11[%c0_19, %c0_20] : memref<8x128xf32, #tpu.memory_space<vmem>>, vector<8x128xf32>
      tpu.vector_store %arg11[%c0_19, %c0_20], %23 {strides = array<i32>} : memref<8x128xf32, #tpu.memory_space<vmem>>, vector<8x128xf32>,
    } else {
    }
    %c8_i32 = arith.constant 8 : i32
    %3 = arith.muli %arg2, %c8_i32 : i32
    %c8_i32_1 = arith.constant 8 : i32
    %4 = arith.muli %arg1, %c8_i32_1 : i32
    %c7_i32 = arith.constant 7 : i32
    %5 = arith.addi %4, %c7_i32 : i32
    %6 = arith.cmpi sle, %3, %5 : i32
    %7 = arith.extui %6 : i1 to i32
    %c0_i32_2 = arith.constant 0 : i32
    %8 = arith.cmpi ne, %7, %c0_i32_2 : i32
    scf.if %8 {
      %c0 = arith.constant 0 : index
      %c0_5 = arith.constant 0 : index
      %c0_6 = arith.constant 0 : index
      %12 = vector.load %arg4[%c0, %c0_5, %c0_6] : memref<1x8x32xf32, #tpu.memory_space<vmem>>, vector<1x8x32xf32>
      %13 = vector.shape_cast %12 : vector<1x8x32xf32> to vector<8x32xf32>
      %c0_7 = arith.constant 0 : index
      %c0_8 = arith.constant 0 : index
      %14 = vector.load %arg6[%c0_7, %c0_8] : memref<32x256xf32, #tpu.memory_space<vmem>>, vector<32x256xf32>
      %cst = arith.constant dense<0.000000e+00> : vector<8x256xf32>
      %15 = tpu.matmul %13, %14, %cst {dimension_numbers = #tpu.dot_dimension_numbers<[1], [0], [0], [1], [0, 0, 1, 1], [], []>} : vector<8x32xf32>, vector<32x256xf32>, vector<8x256xf32> -> vector<8x256xf32>
      %16 = vector.extract_strided_slice %15 {offsets = [0, 0], sizes = [8, 128], strides = [1, 1]} : vector<8x256xf32> to vector<8x128xf32>
      %17 = vector.extract_strided_slice %15 {offsets = [0, 128], sizes = [8, 128], strides = [1, 1]} : vector<8x256xf32> to vector<8x128xf32>
      %c0_9 = arith.constant 0 : index
      %c0_10 = arith.constant 0 : index
      %18 = vector.load %arg8[%c0_9, %c0_10] : memref<8x128xf32, #tpu.memory_space<vmem>>, vector<8x128xf32>
      %cst_11 = arith.constant dense<0.000000e+00> : vector<8x8xf32>
      %19 = tpu.matmul %18, %16, %cst_11 {dimension_numbers = #tpu.dot_dimension_numbers<[1], [1], [0], [0], [0, 0, 1, 0], [], []>} : vector<8x128xf32>, vector<8x128xf32>, vector<8x8xf32> -> vector<8x8xf32>
      %c8_i32_12 = arith.constant 8 : i32
      %20 = arith.muli %arg1, %c8_i32_12 : i32
      %21 = tpu.iota {dimensions = array<i32: 0>} : vector<8x8xi32>
      %22 = vector.broadcast %20 : i32 to vector<8x8xi32>
      %23 = arith.addi %22, %21 : vector<8x8xi32>
      %c8_i32_13 = arith.constant 8 : i32
      %24 = arith.muli %arg2, %c8_i32_13 : i32
      %25 = tpu.iota {dimensions = array<i32: 1>} : vector<8x8xi32>
      %26 = vector.broadcast %24 : i32 to vector<8x8xi32>
      %27 = arith.addi %26, %25 : vector<8x8xi32>
      %28 = arith.cmpi sle, %27, %23 : vector<8x8xi32>
      %cst_14 = arith.constant 0xFF800000 : f32
      %29 = vector.broadcast %cst_14 : f32 to vector<8x8xf32>
      %30 = arith.select %28, %19, %29 : vector<8x8xi1>, vector<8x8xf32>
      %c0_15 = arith.constant 0 : index
      %c0_16 = arith.constant 0 : index
      %31 = vector.load %arg9[%c0_15, %c0_16] : memref<8x1xf32, #tpu.memory_space<vmem>>, vector<8x1xf32>
      %cst_17 = arith.constant dense<0xFF800000> : vector<8xf32>
      %32 = vector.multi_reduction <maximumf>, %30, %cst_17 [1] : vector<8x8xf32> to vector<8xf32>
      %33 = vector.shape_cast %32 : vector<8xf32> to vector<8x1xf32>
      %34 = arith.maximumf %31, %33 : vector<8x1xf32>
      %35 = arith.subf %31, %34 : vector<8x1xf32>
      %36 = math.exp %35 : vector<8x1xf32>
      %37 = vector.broadcast %34 : vector<8x1xf32> to vector<8x8xf32>
      %38 = arith.subf %30, %37 : vector<8x8xf32>
      %39 = math.exp %38 : vector<8x8xf32>
      %c0_18 = arith.constant 0 : index
      %c0_19 = arith.constant 0 : index
      %40 = vector.load %arg10[%c0_18, %c0_19] : memref<8x1xf32, #tpu.memory_space<vmem>>, vector<8x1xf32>
      %41 = arith.mulf %36, %40 : vector<8x1xf32>
      %cst_20 = arith.constant dense<0.000000e+00> : vector<8xf32>
      %42 = vector.multi_reduction <add>, %39, %cst_20 [1] : vector<8x8xf32> to vector<8xf32>
      %43 = vector.shape_cast %42 : vector<8xf32> to vector<8x1xf32>
      %44 = arith.addf %41, %43 : vector<8x1xf32>
      %c0_21 = arith.constant 0 : index
      %c0_22 = arith.constant 0 : index
      %45 = vector.load %arg10[%c0_21, %c0_22] : memref<8x1xf32, #tpu.memory_space<vmem>>, vector<8x1xf32>
      tpu.vector_store %arg10[%c0_21, %c0_22], %44 {strides = array<i32>} : memref<8x1xf32, #tpu.memory_space<vmem>>, vector<8x1xf32>,
      %c0_23 = arith.constant 0 : index
      %c0_24 = arith.constant 0 : index
      %46 = vector.load %arg11[%c0_23, %c0_24] : memref<8x128xf32, #tpu.memory_space<vmem>>, vector<8x128xf32>
      %47 = vector.broadcast %36 : vector<8x1xf32> to vector<8x128xf32>
      %48 = arith.mulf %47, %46 : vector<8x128xf32>
      %cst_25 = arith.constant dense<0.000000e+00> : vector<8x128xf32>
      %49 = tpu.matmul %39, %17, %cst_25 {dimension_numbers = #tpu.dot_dimension_numbers<[1], [0], [0], [1], [0, 0, 1, 1], [], []>} : vector<8x8xf32>, vector<8x128xf32>, vector<8x128xf32> -> vector<8x128xf32>
      %50 = arith.addf %48, %49 : vector<8x128xf32>
      %c0_26 = arith.constant 0 : index
      %c0_27 = arith.constant 0 : index
      %51 = vector.load %arg11[%c0_26, %c0_27] : memref<8x128xf32, #tpu.memory_space<vmem>>, vector<8x128xf32>
      tpu.vector_store %arg11[%c0_26, %c0_27], %50 {strides = array<i32>} : memref<8x128xf32, #tpu.memory_space<vmem>>, vector<8x128xf32>,
      %c0_28 = arith.constant 0 : index
      %c0_29 = arith.constant 0 : index
      %52 = vector.load %arg9[%c0_28, %c0_29] : memref<8x1xf32, #tpu.memory_space<vmem>>, vector<8x1xf32>
      tpu.vector_store %arg9[%c0_28, %c0_29], %34 {strides = array<i32>} : memref<8x1xf32, #tpu.memory_space<vmem>>, vector<8x1xf32>,
    } else {
    }
    %c0_i32_3 = arith.constant 0 : i32
    %9 = arith.cmpi eq, %arg2, %c0_i32_3 : i32
    %10 = arith.extui %9 : i1 to i32
    %c0_i32_4 = arith.constant 0 : i32
    %11 = arith.cmpi ne, %10, %c0_i32_4 : i32
    scf.if %11 {
      %c0 = arith.constant 0 : index
      %c0_5 = arith.constant 0 : index
      %12 = vector.load %arg10[%c0, %c0_5] : memref<8x1xf32, #tpu.memory_space<vmem>>, vector<8x1xf32>
      %13 = tpu.reciprocal %12 : vector<8x1xf32> -> vector<8x1xf32>
      %c0_6 = arith.constant 0 : index
      %c0_7 = arith.constant 0 : index
      %14 = vector.load %arg11[%c0_6, %c0_7] : memref<8x128xf32, #tpu.memory_space<vmem>>, vector<8x128xf32>
      %15 = vector.broadcast %13 : vector<8x1xf32> to vector<8x128xf32>
      %16 = arith.mulf %14, %15 : vector<8x128xf32>
      %c0_8 = arith.constant 0 : index
      %c0_9 = arith.constant 0 : index
      %c0_10 = arith.constant 0 : index
      %17 = vector.load %arg7[%c0_8, %c0_9, %c0_10] : memref<1x8x128xf32, #tpu.memory_space<vmem>>, vector<1x8x128xf32>
      %18 = vector.shape_cast %17 : vector<1x8x128xf32> to vector<8x128xf32>
      %19 = vector.shape_cast %16 : vector<8x128xf32> to vector<1x8x128xf32>
      tpu.vector_store %arg7[%c0_8, %c0_9, %c0_10], %19 {strides = array<i32>} : memref<1x8x128xf32, #tpu.memory_space<vmem>>, vector<1x8x128xf32>,
    } else {
    }
    return
  }
  func.func @transform_0(%arg0: i32, %arg1: i32, %arg2: i32) -> (i32, i32, i32) {
    %c0_i32 = arith.constant 0 : i32
    %c0_i32_0 = arith.constant 0 : i32
    return %arg0, %arg1, %c0_i32 : i32, i32, i32
  }
  func.func @transform_1(%arg0: i32, %arg1: i32, %arg2: i32) -> (i32, i32, i32) {
    %c0_i32 = arith.constant 0 : i32
    %c0_i32_0 = arith.constant 0 : i32
    return %arg0, %arg2, %c0_i32 : i32, i32, i32
  }
  func.func @transform_2(%arg0: i32, %arg1: i32, %arg2: i32) -> (i32, i32) {
    %c0_i32 = arith.constant 0 : i32
    %c0_i32_0 = arith.constant 0 : i32
    %c0_i32_1 = arith.constant 0 : i32
    return %c0_i32, %c0_i32_0 : i32, i32
  }
  func.func @transform_3(%arg0: i32, %arg1: i32, %arg2: i32) -> (i32, i32) {
    %c0_i32 = arith.constant 0 : i32
    %c0_i32_0 = arith.constant 0 : i32
    %c0_i32_1 = arith.constant 0 : i32
    return %c0_i32, %c0_i32_0 : i32, i32
  }
  func.func @transform_4(%arg0: i32, %arg1: i32, %arg2: i32) -> (i32, i32, i32) {
    %c0_i32 = arith.constant 0 : i32
    %c0_i32_0 = arith.constant 0 : i32
    return %arg0, %arg1, %c0_i32 : i32, i32, i32
  }
}

</mosaic_0001>

<llo_original>
// kernel: tpu_custom_call.1
$region0: #{tpu_custom_call.1}
  #allocation0 [shape = 'u32[]', space=smem, size = 0x4, offset = 0x4, fixed_abs, tag = 'smem constant byte address 0x4 - core index']
  #allocation1 [shape = 'u32[144,128]{1,0:T(1,128)}', space=vmem, size = 0x12000, scoped, tag = 'internal scratch']
  #allocation2 [shape = 'f32[8,128]{1,0:T(8,128)}', space=vmem, size = 0x1000, scoped, tag = 'scratch operand']
  #allocation3 [shape = 'f32[8,1]{1,0:T(8,128)}', space=vmem, size = 0x1000, scoped, tag = 'scratch operand']
  #allocation4 [shape = 'f32[8,1]{1,0:T(8,128)}', space=vmem, size = 0x1000, scoped, tag = 'scratch operand']
  #allocation5 [shape = 'f32[8,128]{1,0:T(8,128)}', space=vmem, size = 0x1000, scoped, tag = 'scratch operand']
  %s0 = inlined_call_operand.hbm [shape: f32[2,8,32], index: 0, kind: input, shape index: {}]
  %s1 = inlined_call_operand.hbm [shape: f32[2,8,32], index: 1, kind: input, shape index: {}]
  %s2 = inlined_call_operand.hbm [shape: f32[32,128], index: 2, kind: input, shape index: {}]
  %s3 = inlined_call_operand.hbm [shape: f32[32,256], index: 3, kind: input, shape index: {}]
  %s4 = inlined_call_operand.hbm [shape: f32[2,8,128], index: 4, kind: output, shape index: {}]
  %s5 = sld [smem:[#allocation0]]
  $region77: #{tpu_custom_call.1} parent=0
    _
  %s7 = ssub.s32 1, %s5
  %s8 = scalar_select 0, %s7, %s5
  $region1: #{tpu_custom_call.1} parent=0
    #allocation6 [shape = 'u8[8192]{0}', space=vmem, size = 0x2000, scoped, tag = 'input window, operand 0']
    #allocation7 [shape = 's32[2]{0}', space=sflag, size = 0x8, scoped, tag = 'scoped memory for tpu_custom_call.1']
    #allocation8 [shape = 's32[2]{0}', space=sflag, size = 0x8, scoped, tag = 'scoped memory for tpu_custom_call.1']
    #allocation9 [shape = 'u8[8192]{0}', space=vmem, size = 0x2000, scoped, tag = 'input window, operand 1']
    #allocation10 [shape = 's32[2]{0}', space=sflag, size = 0x8, scoped, tag = 'scoped memory for tpu_custom_call.1']
    #allocation11 [shape = 'u8[16384]{0}', space=vmem, size = 0x4000, scoped, tag = 'input window, operand 2, single buffered']
    #allocation12 [shape = 'u8[32768]{0}', space=vmem, size = 0x8000, scoped, tag = 'input window, operand 3, single buffered']
    #allocation13 [shape = 's32[1]{0}', space=sflag, size = 0x4, scoped, tag = 'scoped memory for tpu_custom_call.1']
    #allocation14 [shape = 'u8[8192]{0}', space=vmem, size = 0x2000, scoped, tag = 'output window, operand 0']
    %9 = vsyncpa [#allocation7], 0
    %s10 = scalar_lea.sflag [#allocation7], 1
    %11 = vsyncpa %s10, 0
    %12 = vsyncpa [#allocation10], 0
    %s13 = scalar_lea.sflag [#allocation10], 1
    %14 = vsyncpa %s13, 0
    %15 = vsyncpa [#allocation13], 0
    %16 = vsyncpa [#allocation8], 0
    %s17 = scalar_lea.sflag [#allocation8], 1
    %18 = vsyncpa %s17, 0
    loop: start=0, step=1, limit=4
    $region2: #{tpu_custom_call.1} parent=1 // loop_pre_header
      _
    $region3: #{tpu_custom_call.1} parent=1 // loop_header
      %s20 = sphi 0, %s24
      %p21 = scmp.ge.s32.totalorder %s20, 4
      %s27 = sphi 0, %s46
      %s28 = sphi 0, %s42
      %s29 = sphi 0, %s38
      %s30 = sphi 0, %s27
      %s31 = sphi 0, %s28
      %s32 = sphi 0, %s29
      %s33 = sphi 0, %s30
      %s34 = sphi 0, %s31
      %s35 = sphi 0, %s32
      %s51 = sphi 0, %s53
      %s54 = sphi 0, %s51
      %s55 = sphi 0, %s54
      %s71 = sphi 0, %s55
      %s79 = sphi 0, %s81
      %s82 = sphi 0, %s79
      %s83 = sphi 0, %s82
      %s99 = sphi 0, %s83
      %s103 = sphi 0, %s103
      %s105 = sphi 0, %s103
      %s106 = sphi 0, %s105
      %s120 = sphi 0, %s106
      %s124 = sphi 0, %s124
      %s126 = sphi 0, %s124
      %s127 = sphi 0, %s126
      %s141 = sphi 0, %s127
      %s149 = sphi 0, %s151
      %s152 = sphi 0, %s149
      %s153 = sphi 0, %s152
      %s169 = sphi 0, %s153
    $region4: #{tpu_custom_call.1} parent=1 // loop_header_branch
      %23 = sbr.rel (%p21) target = $region8
    $region5: #{tpu_custom_call.1} parent=1 // loop_body
      %s25 = ssub.s32 %s20, 1
      %s26 = ssub.s32 %s20, 2
      %s36 = sadd.s32 1, %s29
      %p37 = scmp.ge.s32.totalorder %s36, 1
      %s38 = scalar_select %p37, 0, %s36
      %s39 = sadd.s32 1, %s28
      %s40 = scalar_select %p37, %s39, %s28
      %p41 = scmp.ge.s32.totalorder %s40, 1
      %s42 = scalar_select %p41, 0, %s40
      %s43 = sadd.s32 1, %s27
      %s44 = scalar_select %p41, %s43, %s27
      %p45 = scmp.ge.s32.totalorder %s44, 2
      %s46 = scalar_select %p45, 0, %s44
      %s47 = ssub.s32 %s27, %s46
      %s48 = ssub.s32 %s28, %s42
      %s49 = sor.u32 %s47, %s48
      %p50 = scmp.eq.s32.totalorder %s49, 0
      %s52 = sadd.s32 %s51, 1
      %s53 = scalar_select %p50, %s51, %s52
      %p56 = pneg %p50
      %p57 = scmp.eq.s32.totalorder %s20, 1
      %p58 = por %p56, %p57
      %p59 = scmp.ne.s32.totalorder %s51, %s54
      %p60 = scmp.eq.s32.totalorder %s20, 0
      %p61 = por %p59, %p60
      %p62 = scmp.ne.s32.totalorder %s51, %s54
      %p63 = scmp.eq.s32.totalorder %s25, 1
      %p64 = por %p62, %p63
      %p65 = scmp.ne.s32.totalorder %s54, %s55
      %p66 = scmp.eq.s32.totalorder %s25, 0
      %p67 = por %p65, %p66
      %p68 = scmp.ne.s32.totalorder %s54, %s55
      %p69 = scmp.eq.s32.totalorder %s26, 1
      %p70 = por %p68, %p69
      %p72 = scmp.ne.s32.totalorder %s55, %s71
      %p73 = scmp.eq.s32.totalorder %s26, 0
      %p74 = por %p72, %p73
      %s75 = ssub.s32 %s27, %s46
      %s76 = ssub.s32 %s29, %s38
      %s77 = sor.u32 %s75, %s76
      %p78 = scmp.eq.s32.totalorder %s77, 0
      %s80 = sadd.s32 %s79, 1
      %s81 = scalar_select %p78, %s79, %s80
      %p84 = pneg %p78
      %p85 = scmp.eq.s32.totalorder %s20, 1
      %p86 = por %p84, %p85
      %p87 = scmp.ne.s32.totalorder %s79, %s82
      %p88 = scmp.eq.s32.totalorder %s20, 0
      %p89 = por %p87, %p88
      %p90 = scmp.ne.s32.totalorder %s79, %s82
      %p91 = scmp.eq.s32.totalorder %s25, 1
      %p92 = por %p90, %p91
      %p93 = scmp.ne.s32.totalorder %s82, %s83
      %p94 = scmp.eq.s32.totalorder %s25, 0
      %p95 = por %p93, %p94
      %p96 = scmp.ne.s32.totalorder %s82, %s83
      %p97 = scmp.eq.s32.totalorder %s26, 1
      %p98 = por %p96, %p97
      %p100 = scmp.ne.s32.totalorder %s83, %s99
      %p101 = scmp.eq.s32.totalorder %s26, 0
      %p102 = por %p100, %p101
      %s104 = sadd.s32 %s103, 1
      %p107 = scmp.eq.s32.totalorder %s20, 1
      %p108 = scmp.ne.s32.totalorder %s103, %s105
      %p109 = scmp.eq.s32.totalorder %s20, 0
      %p110 = por %p108, %p109
      %p111 = scmp.ne.s32.totalorder %s103, %s105
      %p112 = scmp.eq.s32.totalorder %s25, 1
      %p113 = por %p111, %p112
      %p114 = scmp.ne.s32.totalorder %s105, %s106
      %p115 = scmp.eq.s32.totalorder %s25, 0
      %p116 = por %p114, %p115
      %p117 = scmp.ne.s32.totalorder %s105, %s106
      %p118 = scmp.eq.s32.totalorder %s26, 1
      %p119 = por %p117, %p118
      %p121 = scmp.ne.s32.totalorder %s106, %s120
      %p122 = scmp.eq.s32.totalorder %s26, 0
      %p123 = por %p121, %p122
      %s125 = sadd.s32 %s124, 1
      %p128 = scmp.eq.s32.totalorder %s20, 1
      %p129 = scmp.ne.s32.totalorder %s124, %s126
      %p130 = scmp.eq.s32.totalorder %s20, 0
      %p131 = por %p129, %p130
      %p132 = scmp.ne.s32.totalorder %s124, %s126
      %p133 = scmp.eq.s32.totalorder %s25, 1
      %p134 = por %p132, %p133
      %p135 = scmp.ne.s32.totalorder %s126, %s127
      %p136 = scmp.eq.s32.totalorder %s25, 0
      %p137 = por %p135, %p136
      %p138 = scmp.ne.s32.totalorder %s126, %s127
      %p139 = scmp.eq.s32.totalorder %s26, 1
      %p140 = por %p138, %p139
      %p142 = scmp.ne.s32.totalorder %s127, %s141
      %p143 = scmp.eq.s32.totalorder %s26, 0
      %p144 = por %p142, %p143
      %s145 = ssub.s32 %s27, %s46
      %s146 = ssub.s32 %s28, %s42
      %s147 = sor.u32 %s145, %s146
      %p148 = scmp.eq.s32.totalorder %s147, 0
      %s150 = sadd.s32 %s149, 1
      %s151 = scalar_select %p148, %s149, %s150
      %p154 = pneg %p148
      %p155 = scmp.eq.s32.totalorder %s20, 1
      %p156 = por %p154, %p155
      %p157 = scmp.ne.s32.totalorder %s149, %s152
      %p158 = scmp.eq.s32.totalorder %s20, 0
      %p159 = por %p157, %p158
      %p160 = scmp.ne.s32.totalorder %s149, %s152
      %p161 = scmp.eq.s32.totalorder %s25, 1
      %p162 = por %p160, %p161
      %p163 = scmp.ne.s32.totalorder %s152, %s153
      %p164 = scmp.eq.s32.totalorder %s25, 0
      %p165 = por %p163, %p164
      %p166 = scmp.ne.s32.totalorder %s152, %s153
      %p167 = scmp.eq.s32.totalorder %s26, 1
      %p168 = por %p166, %p167
      %p170 = scmp.ne.s32.totalorder %s153, %s169
      %p171 = scmp.eq.s32.totalorder %s26, 0
      %p172 = por %p170, %p171
      %p173 = scmp.le.s32.totalorder 1, %s20
      %p174 = scmp.lt.s32.totalorder %s20, 3
      %p175 = pnand %p173, %p174
      %p176 = pneg %p175
      // Predicated region
      $region9: #{tpu_custom_call.1} parent=5 // pred_check
        _
      $region10: #{tpu_custom_call.1} parent=5 // pred_check_branch
        %178 = sbr.rel (%p175) target = $region12
      $region11: #{tpu_custom_call.1} parent=5 // pred_region
        %s179 = ssub.s32 %s20, 1
        // Predicated region
        $region13: #{tpu_custom_call.1} parent=11 // pred_check
          %p180 = pneg %p116
        $region14: #{tpu_custom_call.1} parent=11 // pred_check_branch
          %182 = sbr.rel (%p180) target = $region16
        $region15: #{tpu_custom_call.1} parent=11 // pred_region
          %s184 = ssub.s32 512, 512
          %185 = vsyncadd [#allocation10], %s184
          %s186 = sshll.u32 [#allocation11], 4
          %s187 = int_to_ptr.vmem [resolvable:$true] %s186
          %192 = dma.hbm_to_vmem [thread:$0]  %s2, 512, %s187, [#allocation10], 128, 128, 8
        $region16: #{tpu_custom_call.1} parent=11 // pred_fallthru
          _
        // Predicated region
        $region17: #{tpu_custom_call.1} parent=11 // pred_check
          %p193 = pneg %p137
        $region18: #{tpu_custom_call.1} parent=11 // pred_check_branch
          %195 = sbr.rel (%p193) target = $region20
        $region19: #{tpu_custom_call.1} parent=11 // pred_region
          %s197 = ssub.s32 1024, 1024
          %198 = vsyncadd [#allocation13], %s197
          %s199 = sshll.u32 [#allocation12], 4
          %s200 = int_to_ptr.vmem [resolvable:$true] %s199
          %205 = dma.hbm_to_vmem [thread:$0]  %s3, 1024, %s200, [#allocation13], 256, 256, 16
        $region20: #{tpu_custom_call.1} parent=11 // pred_fallthru
          _
      $region12: #{tpu_custom_call.1} parent=5 // pred_fallthru
        _
      %p206 = scmp.lt.s32.totalorder %s20, 2
      // Predicated region
      $region21: #{tpu_custom_call.1} parent=5 // pred_check
        %p207 = pneg %p206
      $region22: #{tpu_custom_call.1} parent=5 // pred_check_branch
        %209 = sbr.rel (%p207) target = $region24
      $region23: #{tpu_custom_call.1} parent=5 // pred_region
        // Predicated region
        $region25: #{tpu_custom_call.1} parent=23 // pred_check
          %p210 = pneg %p61
        $region26: #{tpu_custom_call.1} parent=23 // pred_check_branch
          %212 = sbr.rel (%p210) target = $region28
        $region27: #{tpu_custom_call.1} parent=23 // pred_region
          %s213 = sand.u32 %s51, 1
          %s214 = scalar_lea.sflag [#allocation7], %s213
          %s215 = sand.u32 %s51, 1
          %s216 = smul.addr %s215, 8
          %s217 = scalar_lea.vmem [#allocation6], %s216
          %s219 = ssub.s32 128, 128
          %220 = vsyncadd %s214, %s219
          %s221 = sadd.s32 %s28, %s27
          %s222 = smul.addr %s221, 128
          %s223 = scalar_lea.hbm %s0, %s222
          %s225 = sshll.u32 %s217, 4
          %s226 = int_to_ptr.vmem [resolvable:$true] %s225
          %228 = dma.hbm_to_vmem [thread:$0]  %s223, 128, %s226, %s214
        $region28: #{tpu_custom_call.1} parent=23 // pred_fallthru
          _
        // Predicated region
        $region29: #{tpu_custom_call.1} parent=23 // pred_check
          %p229 = pneg %p89
        $region30: #{tpu_custom_call.1} parent=23 // pred_check_branch
          %231 = sbr.rel (%p229) target = $region32
        $region31: #{tpu_custom_call.1} parent=23 // pred_region
          %s232 = sand.u32 %s20, 1
          %s233 = scalar_lea.sflag [#allocation10], %s232
          %s234 = sand.u32 %s79, 1
          %s235 = smul.addr %s234, 8
          %s236 = scalar_lea.vmem [#allocation9], %s235
          %s238 = ssub.s32 128, 128
          %239 = vsyncadd %s233, %s238
          %s240 = sadd.s32 %s29, %s27
          %s241 = smul.addr %s240, 128
          %s242 = scalar_lea.hbm %s1, %s241
          %s244 = sshll.u32 %s236, 4
          %s245 = int_to_ptr.vmem [resolvable:$true] %s244
          %247 = dma.hbm_to_vmem [thread:$0]  %s242, 128, %s245, %s233
        $region32: #{tpu_custom_call.1} parent=23 // pred_fallthru
          _
      $region24: #{tpu_custom_call.1} parent=5 // pred_fallthru
        _
      %p248 = scmp.le.s32.totalorder 1, %s20
      %p249 = scmp.lt.s32.totalorder %s20, 3
      %p250 = pnand %p248, %p249
      %p251 = pneg %p250
      // Predicated region
      $region33: #{tpu_custom_call.1} parent=5 // pred_check
        _
      $region34: #{tpu_custom_call.1} parent=5 // pred_check_branch
        %253 = sbr.rel (%p250) target = $region36
      $region35: #{tpu_custom_call.1} parent=5 // pred_region
        %s254 = ssub.s32 %s20, 1
        %s255 = sand.u32 %s54, 1
        %s256 = scalar_lea.sflag [#allocation7], %s255
        %s257 = sand.u32 %s54, 1
        %s258 = smul.addr %s257, 8
        %s259 = scalar_lea.vmem [#allocation6], %s258
        // Predicated region
        $region37: #{tpu_custom_call.1} parent=35 // pred_check
          %p260 = pneg %p67
        $region38: #{tpu_custom_call.1} parent=35 // pred_check_branch
          %262 = sbr.rel (%p260) target = $region40
        $region39: #{tpu_custom_call.1} parent=35 // pred_region
          %263 = dma.done %s256, 128
        $region40: #{tpu_custom_call.1} parent=35 // pred_fallthru
          _
        %s264 = sand.u32 %s25, 1
        %s265 = scalar_lea.sflag [#allocation10], %s264
        %s266 = sand.u32 %s82, 1
        %s267 = smul.addr %s266, 8
        %s268 = scalar_lea.vmem [#allocation9], %s267
        // Predicated region
        $region41: #{tpu_custom_call.1} parent=35 // pred_check
          %p269 = pneg %p95
        $region42: #{tpu_custom_call.1} parent=35 // pred_check_branch
          %271 = sbr.rel (%p269) target = $region44
        $region43: #{tpu_custom_call.1} parent=35 // pred_region
          %272 = dma.done %s265, 128
        $region44: #{tpu_custom_call.1} parent=35 // pred_fallthru
          _
        // Predicated region
        $region45: #{tpu_custom_call.1} parent=35 // pred_check
          %p273 = pneg %p116
        $region46: #{tpu_custom_call.1} parent=35 // pred_check_branch
          %275 = sbr.rel (%p273) target = $region48
        $region47: #{tpu_custom_call.1} parent=35 // pred_region
          %276 = dma.done [#allocation10], 512
        $region48: #{tpu_custom_call.1} parent=35 // pred_fallthru
          _
        // Predicated region
        $region49: #{tpu_custom_call.1} parent=35 // pred_check
          %p277 = pneg %p137
        $region50: #{tpu_custom_call.1} parent=35 // pred_check_branch
          %279 = sbr.rel (%p277) target = $region52
        $region51: #{tpu_custom_call.1} parent=35 // pred_region
          %280 = dma.done [#allocation13], 1024
        $region52: #{tpu_custom_call.1} parent=35 // pred_fallthru
          _
        %s281 = sand.u32 %s54, 1
        %s282 = scalar_lea.sflag [#allocation7], %s281
        %s283 = sand.u32 %s54, 1
        %s284 = smul.addr %s283, 8
        %s285 = scalar_lea.vmem [#allocation6], %s284
        %p286 = pneg %p67
        %p287 = pneg %p64
        %s288 = sand.u32 %s25, 1
        %s289 = scalar_lea.sflag [#allocation10], %s288
        %s290 = sand.u32 %s82, 1
        %s291 = smul.addr %s290, 8
        %s292 = scalar_lea.vmem [#allocation9], %s291
        %p293 = pneg %p95
        %p294 = pneg %p92
        %p295 = pneg %p116
        %p296 = pneg %p113
        %p297 = pneg %p137
        %p298 = pneg %p134
        %p299 = pneg %p165
        %p300 = pneg %p162
        %s301 = sand.u32 %s152, 1
        %s302 = scalar_lea.sflag [#allocation8], %s301
        %s303 = sand.u32 %s152, 1
        %s304 = smul.addr %s303, 8
        %s305 = scalar_lea.vmem [#allocation14], %s304
        %p306 = scmp.eq.s32.totalorder %s32, 0
        // Predicated region
        $region53: #{tpu_custom_call.1} parent=35 // pred_check
          %p307 = pneg %p306
        $region54: #{tpu_custom_call.1} parent=35 // pred_check_branch
          %309 = sbr.rel (%p307) target = $region56
        $region55: #{tpu_custom_call.1} parent=35 // pred_region
          %v310 = vld [vmem:[%s259] sm:$0xff]
          %v311 = vld [vmem:[#allocation11] sm:$0xff]
          %v312 = vld [vmem:[#allocation11 + $0x8] sm:$0xff]
          %v313 = vld [vmem:[#allocation11 + $0x10] sm:$0xff]
          %v314 = vld [vmem:[#allocation11 + $0x18] sm:$0xff]
          %vm315 = vcmask 261120
          %v317 = vsel %vm315, %v310, 0
          %319 = vmatprep.subr.mxu0 0.0
          %320 = vmatpush1.msra.mxu0 %v311
          %321 = vmatprep.subr.mxu0 0.0
          %322 = vmatpush1.msra.mxu0 %v312
          %323 = vmatprep.subr.mxu0 0.0
          %324 = vmatpush1.msra.mxu0 %v313
          %325 = vmatprep.subr.mxu0 0.0
          %326 = vmatpush1.msra.mxu0 %v314
          %327 = vmatprep.subr.mxu0 0.0
          %328 = vmatpush1.msra.mxu0 0.0
          %329 = vmatprep.subr.mxu0 0.0
          %330 = vmatpush1.msra.mxu0 0.0
          %331 = vmatprep.subr.mxu0 0.0
          %332 = vmatpush1.msra.mxu0 0.0
          %333 = vmatprep.subr.mxu0 0.0
          %334 = vmatpush1.msra.mxu0 0.0
          %335 = vmatprep.subr.mxu0 0.0
          %336 = vmatpush1.msra.mxu0 0.0
          %337 = vmatprep.subr.mxu0 0.0
          %338 = vmatpush1.msra.mxu0 0.0
          %339 = vmatprep.subr.mxu0 0.0
          %340 = vmatpush1.msra.mxu0 0.0
          %341 = vmatprep.subr.mxu0 0.0
          %342 = vmatpush1.msra.mxu0 0.0
          %343 = vmatprep.subr.mxu0 0.0
          %344 = vmatpush1.msra.mxu0 0.0
          %345 = vmatprep.subr.mxu0 0.0
          %346 = vmatpush1.msra.mxu0 0.0
          %347 = vmatprep.subr.mxu0 0.0
          %348 = vmatpush1.msra.mxu0 0.0
          %349 = vmatprep.subr.mxu0 0.0
          %350 = vmatpush1.msra.mxu0 0.0
          %351 = vmatprep.subr.mxu0 0.0
          %352 = vmatpush1.msra.mxu0 0.0
          %353 = vmatprep.subr.mxu0 0.0
          %354 = vmatpush1.msra.mxu0 0.0
          %355 = vmatprep.subr.mxu0 0.0
          %356 = vmatpush1.msra.mxu0 0.0
          %357 = vmatprep.subr.mxu0 0.0
          %358 = vmatpush1.msra.mxu0 0.0
          %359 = vmatprep.subr.mxu0 0.0
          %360 = vmatpush1.msra.mxu0 0.0
          %361 = vmatprep.subr.mxu0 0.0
          %362 = vmatpush1.msra.mxu0 0.0
          %363 = vmatprep.subr.mxu0 0.0
          %364 = vmatpush1.msra.mxu0 0.0
          %365 = vmatprep.subr.mxu0 0.0
          %366 = vmatpush1.msra.mxu0 0.0
          %367 = vmatprep.subr.mxu0 0.0
          %368 = vmatpush1.msra.mxu0 0.0
          %369 = vmatprep.subr.mxu0 0.0
          %370 = vmatpush1.msra.mxu0 0.0
          %371 = vmatprep.subr.mxu0 0.0
          %372 = vmatpush1.msra.mxu0 0.0
          %373 = vmatprep.subr.mxu0 0.0
          %374 = vmatpush1.msra.mxu0 0.0
          %375 = vmatprep.subr.mxu0 0.0
          %376 = vmatpush1.msra.mxu0 0.0
          %377 = vmatprep.subr.mxu0 0.0
          %378 = vmatpush1.msra.mxu0 0.0
          %379 = vmatprep.subr.mxu0 0.0
          %380 = vmatpush1.msra.mxu0 0.0
          %381 = vmatprep.subr.mxu0 0.0
          %382 = vmatpush1.msra.mxu0 0.0
          %383 = vmatprep.mubr.f32.mxu0 0.0
          %384 = vmatmul.mubr.f32.gmra.mrb[0].mxu0 %v317
          %v385 = vpop.f32.mrb[0].mxu0
          %v386 = vadd.f32 0.0, %v385
          %v387 = vpop.f32.mrb[0].mxu0
          %388 = vdwg.mxu0
          %v389 = vmul.f32 %v386, 4.0
          %390 = vst [vmem:[#allocation2] sm:$0xff] %v389
          %vm391 = vcmask 7168
          %392 = vst.msk [vmem:[#allocation3] sm:$0xff] %vm391, -inf
          %393 = vst.msk [vmem:[#allocation4] sm:$0xff] %vm391, 0.0
          %394 = vst [vmem:[#allocation5] sm:$0xff] 0.0
        $region56: #{tpu_custom_call.1} parent=35 // pred_fallthru
          _
        %s395 = smul.u32 %s32, 8
        %s396 = smul.u32 %s31, 8
        %s397 = sadd.s32 %s396, 7
        %p398 = scmp.le.s32.totalorder %s395, %s397
        // Predicated region
        $region57: #{tpu_custom_call.1} parent=35 // pred_check
          %p399 = pneg %p398
        $region58: #{tpu_custom_call.1} parent=35 // pred_check_branch
          %401 = sbr.rel (%p399) target = $region60
        $region59: #{tpu_custom_call.1} parent=35 // pred_region
          %v402 = vld [vmem:[%s268] sm:$0xff]
          %v403 = vld [vmem:[#allocation12] sm:$0xff]
          %v404 = vld [vmem:[#allocation12 + $0x8] sm:$0xff]
          %v405 = vld [vmem:[#allocation12 + $0x10] sm:$0xff]
          %v406 = vld [vmem:[#allocation12 + $0x18] sm:$0xff]
          %v407 = vld [vmem:[#allocation12 + $0x20] sm:$0xff]
          %v408 = vld [vmem:[#allocation12 + $0x28] sm:$0xff]
          %v409 = vld [vmem:[#allocation12 + $0x30] sm:$0xff]
          %v410 = vld [vmem:[#allocation12 + $0x38] sm:$0xff]
          %vm411 = vcmask 261120
          %v413 = vsel %vm411, %v402, 0
          %415 = vmatprep.subr.mxu0 %v404
          %416 = vmatpush1.msra.mxu0 %v403
          %417 = vmatprep.subr.mxu0 %v406
          %418 = vmatpush1.msra.mxu0 %v405
          %419 = vmatprep.subr.mxu0 %v408
          %420 = vmatpush1.msra.mxu0 %v407
          %421 = vmatprep.subr.mxu0 %v410
          %422 = vmatpush1.msra.mxu0 %v409
          %423 = vmatprep.subr.mxu0 0.0
          %424 = vmatpush1.msra.mxu0 0.0
          %425 = vmatprep.subr.mxu0 0.0
          %426 = vmatpush1.msra.mxu0 0.0
          %427 = vmatprep.subr.mxu0 0.0
          %428 = vmatpush1.msra.mxu0 0.0
          %429 = vmatprep.subr.mxu0 0.0
          %430 = vmatpush1.msra.mxu0 0.0
          %431 = vmatprep.subr.mxu0 0.0
          %432 = vmatpush1.msra.mxu0 0.0
          %433 = vmatprep.subr.mxu0 0.0
          %434 = vmatpush1.msra.mxu0 0.0
          %435 = vmatprep.subr.mxu0 0.0
          %436 = vmatpush1.msra.mxu0 0.0
          %437 = vmatprep.subr.mxu0 0.0
          %438 = vmatpush1.msra.mxu0 0.0
          %439 = vmatprep.subr.mxu0 0.0
          %440 = vmatpush1.msra.mxu0 0.0
          %441 = vmatprep.subr.mxu0 0.0
          %442 = vmatpush1.msra.mxu0 0.0
          %443 = vmatprep.subr.mxu0 0.0
          %444 = vmatpush1.msra.mxu0 0.0
          %445 = vmatprep.subr.mxu0 0.0
          %446 = vmatpush1.msra.mxu0 0.0
          %447 = vmatprep.subr.mxu0 0.0
          %448 = vmatpush1.msra.mxu0 0.0
          %449 = vmatprep.subr.mxu0 0.0
          %450 = vmatpush1.msra.mxu0 0.0
          %451 = vmatprep.subr.mxu0 0.0
          %452 = vmatpush1.msra.mxu0 0.0
          %453 = vmatprep.subr.mxu0 0.0
          %454 = vmatpush1.msra.mxu0 0.0
          %455 = vmatprep.subr.mxu0 0.0
          %456 = vmatpush1.msra.mxu0 0.0
          %457 = vmatprep.subr.mxu0 0.0
          %458 = vmatpush1.msra.mxu0 0.0
          %459 = vmatprep.subr.mxu0 0.0
          %460 = vmatpush1.msra.mxu0 0.0
          %461 = vmatprep.subr.mxu0 0.0
          %462 = vmatpush1.msra.mxu0 0.0
          %463 = vmatprep.subr.mxu0 0.0
          %464 = vmatpush1.msra.mxu0 0.0
          %465 = vmatprep.subr.mxu0 0.0
          %466 = vmatpush1.msra.mxu0 0.0
          %467 = vmatprep.subr.mxu0 0.0
          %468 = vmatpush1.msra.mxu0 0.0
          %469 = vmatprep.subr.mxu0 0.0
          %470 = vmatpush1.msra.mxu0 0.0
          %471 = vmatprep.subr.mxu0 0.0
          %472 = vmatpush1.msra.mxu0 0.0
          %473 = vmatprep.subr.mxu0 0.0
          %474 = vmatpush1.msra.mxu0 0.0
          %475 = vmatprep.subr.mxu0 0.0
          %476 = vmatpush1.msra.mxu0 0.0
          %477 = vmatprep.subr.mxu0 0.0
          %478 = vmatpush1.msra.mxu0 0.0
          %479 = vmatprep.mubr.f32.mxu0 0.0
          %480 = vmatmul.mubr.f32.gmra.mrb[0].mxu0 %v413
          %v481 = vpop.f32.mrb[0].mxu0
          %v482 = vadd.f32 0.0, %v481
          %v483 = vpop.f32.mrb[0].mxu0
          %v484 = vadd.f32 0.0, %v483
          %485 = vdwg.mxu0
          %v486 = vld [vmem:[#allocation2] sm:$0xff]
          %487 = vmatprep.subr.mxu0 0.0
          %488 = vmatpush1.xpose.msra.mxu0 %v482
          %489 = vmatprep.subr.mxu0 0.0
          %490 = vmatpush1.xpose.msra.mxu0 0.0
          %491 = vmatprep.subr.mxu0 0.0
          %492 = vmatpush1.xpose.msra.mxu0 0.0
          %493 = vmatprep.subr.mxu0 0.0
          %494 = vmatpush1.xpose.msra.mxu0 0.0
          %495 = vmatprep.subr.mxu0 0.0
          %496 = vmatpush1.xpose.msra.mxu0 0.0
          %497 = vmatprep.subr.mxu0 0.0
          %498 = vmatpush1.xpose.msra.mxu0 0.0
          %499 = vmatprep.subr.mxu0 0.0
          %500 = vmatpush1.xpose.msra.mxu0 0.0
          %501 = vmatprep.subr.mxu0 0.0
          %502 = vmatpush1.xpose.msra.mxu0 0.0
          %503 = vmatprep.subr.mxu0 0.0
          %504 = vmatpush1.xpose.msra.mxu0 0.0
          %505 = vmatprep.subr.mxu0 0.0
          %506 = vmatpush1.xpose.msra.mxu0 0.0
          %507 = vmatprep.subr.mxu0 0.0
          %508 = vmatpush1.xpose.msra.mxu0 0.0
          %509 = vmatprep.subr.mxu0 0.0
          %510 = vmatpush1.xpose.msra.mxu0 0.0
          %511 = vmatprep.subr.mxu0 0.0
          %512 = vmatpush1.xpose.msra.mxu0 0.0
          %513 = vmatprep.subr.mxu0 0.0
          %514 = vmatpush1.xpose.msra.mxu0 0.0
          %515 = vmatprep.subr.mxu0 0.0
          %516 = vmatpush1.xpose.msra.mxu0 0.0
          %517 = vmatprep.subr.mxu0 0.0
          %518 = vmatpush1.xpose.msra.mxu0 0.0
          %519 = vmatprep.subr.mxu0 0.0
          %520 = vmatpush1.xpose.msra.mxu0 0.0
          %521 = vmatprep.subr.mxu0 0.0
          %522 = vmatpush1.xpose.msra.mxu0 0.0
          %523 = vmatprep.subr.mxu0 0.0
          %524 = vmatpush1.xpose.msra.mxu0 0.0
          %525 = vmatprep.subr.mxu0 0.0
          %526 = vmatpush1.xpose.msra.mxu0 0.0
          %527 = vmatprep.subr.mxu0 0.0
          %528 = vmatpush1.xpose.msra.mxu0 0.0
          %529 = vmatprep.subr.mxu0 0.0
          %530 = vmatpush1.xpose.msra.mxu0 0.0
          %531 = vmatprep.subr.mxu0 0.0
          %532 = vmatpush1.xpose.msra.mxu0 0.0
          %533 = vmatprep.subr.mxu0 0.0
          %534 = vmatpush1.xpose.msra.mxu0 0.0
          %535 = vmatprep.subr.mxu0 0.0
          %536 = vmatpush1.xpose.msra.mxu0 0.0
          %537 = vmatprep.subr.mxu0 0.0
          %538 = vmatpush1.xpose.msra.mxu0 0.0
          %539 = vmatprep.subr.mxu0 0.0
          %540 = vmatpush1.xpose.msra.mxu0 0.0
          %541 = vmatprep.subr.mxu0 0.0
          %542 = vmatpush1.xpose.msra.mxu0 0.0
          %543 = vmatprep.subr.mxu0 0.0
          %544 = vmatpush1.xpose.msra.mxu0 0.0
          %545 = vmatprep.subr.mxu0 0.0
          %546 = vmatpush1.xpose.msra.mxu0 0.0
          %547 = vmatprep.subr.mxu0 0.0
          %548 = vmatpush1.xpose.msra.mxu0 0.0
          %549 = vmatprep.subr.mxu0 0.0
          %550 = vmatpush1.xpose.msra.mxu0 0.0
          %551 = vmatprep.mubr.f32.mxu0 0.0
          %552 = vmatmul.mubr.f32.gmra.mrb[0].mxu0 %v486
          %v553 = vpop.f32.mrb[0].mxu0
          %v554 = vadd.f32 0.0, %v553
          %v555 = vpop.f32.mrb[0].mxu0
          %556 = vdwg.mxu0
          %v557 = vlaneseq
          %v558 = vshrl.u32 %v557, 7
          %v559 = vstv %s396
          %v560 = vadd.s32 %v559, %v558
          %v561 = vlaneseq
          %v562 = vand.u32 %v561, 127
          %v563 = vstv %s395
          %v564 = vadd.s32 %v563, %v562
          %vm565 = vcmp.le.s32.totalorder %v564, %v560
          %v566 = vsel %vm565, %v554, -inf
          %v567 = vld [vmem:[#allocation3] sm:$0xff]
          %vm568 = vcmask 64512
          %v569 = vsel %vm568, %v566, -inf
          %570 = vmax.xlane.f32.xlu0 %v569
          %v571 = vpop.xlane.xlu0 %570
          %v572 = vmax.f32 %v567, %v571
          %v573 = vsub.f32 %v567, %v572
          %v574 = vmul.f32 %v573, 1.442695
          %v575 = vpow.pop %v574
          %577 = vset.pattern.permute.xlu0 0
          %578 = vperm.xlu0 %577, %v572
          %v579 = vpop.permute.xlu0 %578
          %v581 = vsub.f32 %v566, %v579
          %v582 = vmul.f32 %v581, 1.442695
          %v583 = vpow.pop %v582
          %v584 = vld [vmem:[#allocation4] sm:$0xff]
          %v585 = vmul.f32 %v575, %v584
          %v586 = vsel %vm568, %v583, 0.0
          %587 = vadd.xlane.f32.xlu0 %v586
          %v588 = vpop.xlane.xlu0 %587
          %v589 = vadd.f32 %v585, %v588
          %vm590 = vcmask 7168
          %591 = vst.msk [vmem:[#allocation4] sm:$0xff] %vm590, %v589
          %v592 = vld [vmem:[#allocation5] sm:$0xff]
          %594 = vset.pattern.permute.xlu0 0
          %595 = vperm.xlu0 %594, %v575
          %v596 = vpop.permute.xlu0 %595
          %v598 = vmul.f32 %v596, %v592
          %v600 = vsel %vm568, %v583, 0
          %602 = vmatprep.subr.mxu0 0.0
          %603 = vmatpush1.msra.mxu0 %v484
          %604 = vmatprep.subr.mxu0 0.0
          %605 = vmatpush1.msra.mxu0 0.0
          %606 = vmatprep.subr.mxu0 0.0
          %607 = vmatpush1.msra.mxu0 0.0
          %608 = vmatprep.subr.mxu0 0.0
          %609 = vmatpush1.msra.mxu0 0.0
          %610 = vmatprep.subr.mxu0 0.0
          %611 = vmatpush1.msra.mxu0 0.0
          %612 = vmatprep.subr.mxu0 0.0
          %613 = vmatpush1.msra.mxu0 0.0
          %614 = vmatprep.subr.mxu0 0.0
          %615 = vmatpush1.msra.mxu0 0.0
          %616 = vmatprep.subr.mxu0 0.0
          %617 = vmatpush1.msra.mxu0 0.0
          %618 = vmatprep.subr.mxu0 0.0
          %619 = vmatpush1.msra.mxu0 0.0
          %620 = vmatprep.subr.mxu0 0.0
          %621 = vmatpush1.msra.mxu0 0.0
          %622 = vmatprep.subr.mxu0 0.0
          %623 = vmatpush1.msra.mxu0 0.0
          %624 = vmatprep.subr.mxu0 0.0
          %625 = vmatpush1.msra.mxu0 0.0
          %626 = vmatprep.subr.mxu0 0.0
          %627 = vmatpush1.msra.mxu0 0.0
          %628 = vmatprep.subr.mxu0 0.0
          %629 = vmatpush1.msra.mxu0 0.0
          %630 = vmatprep.subr.mxu0 0.0
          %631 = vmatpush1.msra.mxu0 0.0
          %632 = vmatprep.subr.mxu0 0.0
          %633 = vmatpush1.msra.mxu0 0.0
          %634 = vmatprep.subr.mxu0 0.0
          %635 = vmatpush1.msra.mxu0 0.0
          %636 = vmatprep.subr.mxu0 0.0
          %637 = vmatpush1.msra.mxu0 0.0
          %638 = vmatprep.subr.mxu0 0.0
          %639 = vmatpush1.msra.mxu0 0.0
          %640 = vmatprep.subr.mxu0 0.0
          %641 = vmatpush1.msra.mxu0 0.0
          %642 = vmatprep.subr.mxu0 0.0
          %643 = vmatpush1.msra.mxu0 0.0
          %644 = vmatprep.subr.mxu0 0.0
          %645 = vmatpush1.msra.mxu0 0.0
          %646 = vmatprep.subr.mxu0 0.0
          %647 = vmatpush1.msra.mxu0 0.0
          %648 = vmatprep.subr.mxu0 0.0
          %649 = vmatpush1.msra.mxu0 0.0
          %650 = vmatprep.subr.mxu0 0.0
          %651 = vmatpush1.msra.mxu0 0.0
          %652 = vmatprep.subr.mxu0 0.0
          %653 = vmatpush1.msra.mxu0 0.0
          %654 = vmatprep.subr.mxu0 0.0
          %655 = vmatpush1.msra.mxu0 0.0
          %656 = vmatprep.subr.mxu0 0.0
          %657 = vmatpush1.msra.mxu0 0.0
          %658 = vmatprep.subr.mxu0 0.0
          %659 = vmatpush1.msra.mxu0 0.0
          %660 = vmatprep.subr.mxu0 0.0
          %661 = vmatpush1.msra.mxu0 0.0
          %662 = vmatprep.subr.mxu0 0.0
          %663 = vmatpush1.msra.mxu0 0.0
          %664 = vmatprep.subr.mxu0 0.0
          %665 = vmatpush1.msra.mxu0 0.0
          %666 = vmatprep.mubr.f32.mxu0 0.0
          %667 = vmatmul.mubr.f32.gmra.mrb[0].mxu0 %v600
          %v668 = vpop.f32.mrb[0].mxu0
          %v669 = vadd.f32 0.0, %v668
          %v670 = vpop.f32.mrb[0].mxu0
          %671 = vdwg.mxu0
          %v672 = vadd.f32 %v598, %v669
          %673 = vst [vmem:[#allocation5] sm:$0xff] %v672
          %674 = vst.msk [vmem:[#allocation3] sm:$0xff] %vm590, %v572
        $region60: #{tpu_custom_call.1} parent=35 // pred_fallthru
          _
        // Predicated region
        $region61: #{tpu_custom_call.1} parent=35 // pred_check
          %p675 = pneg %p306
        $region62: #{tpu_custom_call.1} parent=35 // pred_check_branch
          %677 = sbr.rel (%p675) target = $region64
        $region63: #{tpu_custom_call.1} parent=35 // pred_region
          %v678 = vld [vmem:[#allocation4] sm:$0xff]
          %v679 = vrcp.pop %v678
          %v680 = vld [vmem:[#allocation5] sm:$0xff]
          %682 = vset.pattern.permute.xlu0 0
          %683 = vperm.xlu0 %682, %v679
          %v684 = vpop.permute.xlu0 %683
          %v686 = vmul.f32 %v680, %v684
          %687 = vst [vmem:[%s305] sm:$0xff] %v686
        $region64: #{tpu_custom_call.1} parent=35 // pred_fallthru
          _
        %s688 = sand.u32 %s152, 1
        %s689 = scalar_lea.sflag [#allocation8], %s688
        %s690 = sand.u32 %s152, 1
        %s691 = smul.addr %s690, 8
        %s692 = scalar_lea.vmem [#allocation14], %s691
        // Predicated region
        $region65: #{tpu_custom_call.1} parent=35 // pred_check
          %p693 = pneg %p162
        $region66: #{tpu_custom_call.1} parent=35 // pred_check_branch
          %695 = sbr.rel (%p693) target = $region68
        $region67: #{tpu_custom_call.1} parent=35 // pred_region
          %s697 = ssub.s32 128, 128
          %698 = vsyncadd %s689, %s697
          %s699 = sadd.s32 %s31, %s30
          %s700 = smul.addr %s699, 128
          %s701 = scalar_lea.hbm %s4, %s700
          %s703 = sshll.u32 %s692, 4
          %s704 = int_to_ptr.vmem [resolvable:$true] %s703
          %706 = dma.vmem_to_hbm [thread:$0]  %s704, 128, %s701, %s689
        $region68: #{tpu_custom_call.1} parent=35 // pred_fallthru
          _
      $region36: #{tpu_custom_call.1} parent=5 // pred_fallthru
        _
      %p707 = scmp.le.s32.totalorder 2, %s20
      // Predicated region
      $region69: #{tpu_custom_call.1} parent=5 // pred_check
        %p708 = pneg %p707
      $region70: #{tpu_custom_call.1} parent=5 // pred_check_branch
        %710 = sbr.rel (%p708) target = $region72
      $region71: #{tpu_custom_call.1} parent=5 // pred_region
        %s711 = ssub.s32 %s20, 2
        // Predicated region
        $region73: #{tpu_custom_call.1} parent=71 // pred_check
          %p712 = pneg %p168
        $region74: #{tpu_custom_call.1} parent=71 // pred_check_branch
          %714 = sbr.rel (%p712) target = $region76
        $region75: #{tpu_custom_call.1} parent=71 // pred_region
          %s715 = sand.u32 %s153, 1
          %s716 = scalar_lea.sflag [#allocation8], %s715
          %s717 = sand.u32 %s153, 1
          %s718 = smul.addr %s717, 8
          %s719 = scalar_lea.vmem [#allocation14], %s718
          %720 = dma.done %s716, 128
        $region76: #{tpu_custom_call.1} parent=71 // pred_fallthru
          _
      $region72: #{tpu_custom_call.1} parent=5 // pred_fallthru
        _
    $region6: #{tpu_custom_call.1} parent=1 // loop_footer
      %s24 = sadd.s32 1, %s20
    $region7: #{tpu_custom_call.1} parent=1 // loop_footer_branch
      %19 = sbr.rel target = $region3
    $region8: #{tpu_custom_call.1} parent=1 // loop_exit
      _
    %721 = vsyncpa [#allocation7], 1
    %s722 = scalar_lea.sflag [#allocation7], 1
    %723 = vsyncpa %s722, 1
    %724 = vsyncpa [#allocation10], 1
    %s725 = scalar_lea.sflag [#allocation10], 1
    %726 = vsyncpa %s725, 1
    %727 = vsyncpa [#allocation13], 1
    %728 = vsyncpa [#allocation8], 1
    %s729 = scalar_lea.sflag [#allocation8], 1
    %730 = vsyncpa %s729, 1

</llo_original>
